<compile_context>
chip_gen: v7x
topology: tpu7x:2x2x1
jax: 0.10.0
libtpu: 0.0.40
codegen_flags: <defaults>
</compile_context>

<pallas_src>
import functools

import jax
import jax.numpy as jnp
from jax.experimental import pallas as pl
from jax.experimental.pallas import tpu as pltpu

_LANES = 128
_HIDDEN = 5
_TARGET_STEPS = 16          # aim for ~16 grid steps (pipelining + 2 TCs on v7x)
_BLK_CAP_DEFAULT = 4096     # 4096x128xf32 = 2 MiB per buffer


def _round_up(v, m):
    return ((v + m - 1) // m) * m


def _simplenet_kernel(w1_ref, b1_ref, w2_ref, b2_ref, x_ref, o_ref):
    """One (blk, 128) lane-dense batch tile; weights/biases are SMEM scalars."""
    x = x_ref[...]                                    # (blk, 128) f32
    acc = jnp.zeros_like(x)
    # Fully unrolled over the 5 hidden units: pure VPU mul/add/max, no MXU.
    for j in range(_HIDDEN):
        h = jnp.maximum(x * w1_ref[j] + b1_ref[j], 0.0)   # ReLU(w1_j*x + b1_j)
        acc = acc + h * w2_ref[j]
    y = acc + b2_ref[0]
    # sigmoid(y) == 0.5*(tanh(y/2)+1); tanh runs on the EUP (separate VLIW slot).
    o_ref[...] = 0.5 * (jnp.tanh(0.5 * y) + 1.0)


@functools.partial(jax.jit, static_argnames=("block_rows",))
def simplenet_forward(x, w1, b1, w2, b2, *, block_rows=None):
    """x: (N, 1) f32; w1: (1, 5); b1: (1, 5); w2: (5, 1); b2: (1, 1)."""
    n = x.shape[0]

    # --- lane-dense view: (N, 1) -> (rows, 128), zero-copy when 128 | N ------
    rows = pl.cdiv(n, _LANES)
    n_slab = rows * _LANES
    x_flat = x.reshape(-1).astype(jnp.float32)
    if n_slab != n:
        # Small pad (< 128 elems of extra data); only taken when 128 does not
        # divide N.  Ragged grid blocks are handled by Pallas masking instead.
        x_flat = jnp.pad(x_flat, (0, n_slab - n))
    x_slab = x_flat.reshape(rows, _LANES)

    # --- block-rows selection -------------------------------------------------
    if block_rows is None:
        blk_cap = _BLK_CAP_DEFAULT
    else:
        blk_cap = max(8, _round_up(block_rows, 8))
    if rows <= 8:
        blk = rows                                   # block == full array dim
    else:
        blk = _round_up(pl.cdiv(rows, _TARGET_STEPS), 8)
        blk = min(max(blk, 256), blk_cap)            # clamp to [256, cap]
        blk = min(blk, _round_up(rows, 8))           # don't exceed the slab
    num_steps = pl.cdiv(rows, blk)

    # Weights/biases as flat f32 scalars for SMEM.
    w1f = w1.reshape(_HIDDEN).astype(jnp.float32)
    b1f = b1.reshape(_HIDDEN).astype(jnp.float32)
    w2f = w2.reshape(_HIDDEN).astype(jnp.float32)
    b2f = b2.reshape(1).astype(jnp.float32)

    smem = pl.BlockSpec(memory_space=pltpu.MemorySpace.SMEM)
    in_tile_kwargs = {}
    if num_steps >= 3:
        in_tile_kwargs["pipeline_mode"] = pl.Buffered(3)
    in_tile = pl.BlockSpec((blk, _LANES), lambda i: (i, 0), **in_tile_kwargs)
    out_tile = pl.BlockSpec((blk, _LANES), lambda i: (i, 0))

    out = pl.pallas_call(
        _simplenet_kernel,
        out_shape=jax.ShapeDtypeStruct((rows, _LANES), jnp.float32),
        grid=(num_steps,),
        in_specs=[smem, smem, smem, smem, in_tile],
        out_specs=out_tile,
        compiler_params=pltpu.CompilerParams(
            dimension_semantics=("parallel",)),
        cost_estimate=pl.CostEstimate(
            flops=30 * n_slab,
            transcendentals=n_slab,
            bytes_accessed=8 * n_slab),
    )(w1f, b1f, w2f, b2f, x_slab)

    # Undo the lane-dense view (free when 128 | N).
    out_flat = out.reshape(-1)
    if n_slab != n:
        out_flat = out_flat[:n]
    return out_flat.reshape(n, 1)


def init_params(key):
    # Deterministic init mimicking torch's Linear (uniform in +-1/sqrt(fan_in)).
    k1, k2, k3, k4 = jax.random.split(key, 4)
    bound1 = 1.0 / jnp.sqrt(1.0)   # fan_in = 1
    bound2 = 1.0 / jnp.sqrt(5.0)   # fan_in = 5
    w1 = jax.random.uniform(k1, (1, 5), jnp.float32, -bound1, bound1)
    b1 = jax.random.uniform(k2, (1, 5), jnp.float32, -bound1, bound1)
    w2 = jax.random.uniform(k3, (5, 1), jnp.float32, -bound2, bound2)
    b2 = jax.random.uniform(k4, (1, 1), jnp.float32, -bound2, bound2)
    return w1, b1, w2, b2


def reference_forward(x, w1, b1, w2, b2):
    h = jnp.maximum(x @ w1 + b1, 0.0)
    return jax.nn.sigmoid(h @ w2 + b2)


if __name__ == "__main__":
    key = jax.random.PRNGKey(0)
    pkey, xkey = jax.random.split(key)
    w1, b1, w2, b2 = init_params(pkey)

    # Small batch of scalar-feature inputs, matching Linear(1, 5)'s input dim.
    x = jax.random.normal(xkey, (8, 1), jnp.float32)
    out = jax.block_until_ready(simplenet_forward(x, w1, b1, w2, b2))
    ref = reference_forward(x, w1, b1, w2, b2)
    assert out.shape == (8, 1)
    assert jnp.allclose(out, ref, atol=1e-5, rtol=1e-5)

    # Pad + ragged-element path (N % 128 != 0).
    x_med = jax.random.normal(jax.random.PRNGKey(1), (300, 1), jnp.float32)
    out_med = jax.block_until_ready(simplenet_forward(x_med, w1, b1, w2, b2))
    ref_med = reference_forward(x_med, w1, b1, w2, b2)
    assert out_med.shape == (300, 1)
    assert jnp.allclose(out_med, ref_med, atol=1e-5, rtol=1e-5)

    # Zero-copy path (128 | N) with a multi-step, triple-buffered grid.
    x_big = jax.random.normal(jax.random.PRNGKey(2), (4096, 1), jnp.float32)
    out_big = jax.block_until_ready(
        simplenet_forward(x_big, w1, b1, w2, b2, block_rows=8))
    ref_big = reference_forward(x_big, w1, b1, w2, b2)
    assert out_big.shape == (4096, 1)
    assert jnp.allclose(out_big, ref_big, atol=1e-5, rtol=1e-5)

    print("KERNEL_OK")
</pallas_src>

<mosaic_0001>
module attributes {stable_mosaic.version = 11 : i64} {
  func.func @_simplenet_kernel(%arg0: i32, %arg1: memref<5xf32, #tpu.memory_space<smem>>, %arg2: memref<5xf32, #tpu.memory_space<smem>>, %arg3: memref<5xf32, #tpu.memory_space<smem>>, %arg4: memref<1xf32, #tpu.memory_space<smem>>, %arg5: memref<1x128xf32, #tpu.memory_space<vmem>>, %arg6: memref<1x128xf32, #tpu.memory_space<vmem>>) attributes {dimension_semantics = [#tpu.dimension_semantics<parallel>], iteration_bounds = array<i64: 1>, scalar_prefetch = 0 : i64, scratch_operands = 0 : i64, tpu.core_type = #tpu.core_type<tc>, window_params = [{transform_indices = @transform_0, window_bounds = array<i64: 5>}, {transform_indices = @transform_1, window_bounds = array<i64: 5>}, {transform_indices = @transform_2, window_bounds = array<i64: 5>}, {transform_indices = @transform_3, window_bounds = array<i64: 1>}, {transform_indices = @transform_4, window_bounds = array<i64: 1, 128>}, {transform_indices = @transform_5, window_bounds = array<i64: 1, 128>}]} {
    %c0 = arith.constant 0 : index
    %c0_0 = arith.constant 0 : index
    %0 = vector.load %arg5[%c0, %c0_0] : memref<1x128xf32, #tpu.memory_space<vmem>>, vector<1x128xf32>
    %cst = arith.constant 0.000000e+00 : f32
    %1 = vector.broadcast %cst : f32 to vector<1x128xf32>
    %c0_1 = arith.constant 0 : index
    %2 = memref.load %arg1[%c0_1] : memref<5xf32, #tpu.memory_space<smem>>
    %3 = vector.broadcast %2 : f32 to vector<1x128xf32>
    %4 = arith.mulf %0, %3 : vector<1x128xf32>
    %c0_2 = arith.constant 0 : index
    %5 = memref.load %arg2[%c0_2] : memref<5xf32, #tpu.memory_space<smem>>
    %6 = vector.broadcast %5 : f32 to vector<1x128xf32>
    %7 = arith.addf %4, %6 : vector<1x128xf32>
    %cst_3 = arith.constant 0.000000e+00 : f32
    %8 = vector.broadcast %cst_3 : f32 to vector<1x128xf32>
    %9 = arith.maximumf %7, %8 : vector<1x128xf32>
    %c0_4 = arith.constant 0 : index
    %10 = memref.load %arg3[%c0_4] : memref<5xf32, #tpu.memory_space<smem>>
    %11 = vector.broadcast %10 : f32 to vector<1x128xf32>
    %12 = arith.mulf %9, %11 : vector<1x128xf32>
    %13 = arith.addf %1, %12 : vector<1x128xf32>
    %c1 = arith.constant 1 : index
    %14 = memref.load %arg1[%c1] : memref<5xf32, #tpu.memory_space<smem>>
    %15 = vector.broadcast %14 : f32 to vector<1x128xf32>
    %16 = arith.mulf %0, %15 : vector<1x128xf32>
    %c1_5 = arith.constant 1 : index
    %17 = memref.load %arg2[%c1_5] : memref<5xf32, #tpu.memory_space<smem>>
    %18 = vector.broadcast %17 : f32 to vector<1x128xf32>
    %19 = arith.addf %16, %18 : vector<1x128xf32>
    %cst_6 = arith.constant 0.000000e+00 : f32
    %20 = vector.broadcast %cst_6 : f32 to vector<1x128xf32>
    %21 = arith.maximumf %19, %20 : vector<1x128xf32>
    %c1_7 = arith.constant 1 : index
    %22 = memref.load %arg3[%c1_7] : memref<5xf32, #tpu.memory_space<smem>>
    %23 = vector.broadcast %22 : f32 to vector<1x128xf32>
    %24 = arith.mulf %21, %23 : vector<1x128xf32>
    %25 = arith.addf %13, %24 : vector<1x128xf32>
    %c2 = arith.constant 2 : index
    %26 = memref.load %arg1[%c2] : memref<5xf32, #tpu.memory_space<smem>>
    %27 = vector.broadcast %26 : f32 to vector<1x128xf32>
    %28 = arith.mulf %0, %27 : vector<1x128xf32>
    %c2_8 = arith.constant 2 : index
    %29 = memref.load %arg2[%c2_8] : memref<5xf32, #tpu.memory_space<smem>>
    %30 = vector.broadcast %29 : f32 to vector<1x128xf32>
    %31 = arith.addf %28, %30 : vector<1x128xf32>
    %cst_9 = arith.constant 0.000000e+00 : f32
    %32 = vector.broadcast %cst_9 : f32 to vector<1x128xf32>
    %33 = arith.maximumf %31, %32 : vector<1x128xf32>
    %c2_10 = arith.constant 2 : index
    %34 = memref.load %arg3[%c2_10] : memref<5xf32, #tpu.memory_space<smem>>
    %35 = vector.broadcast %34 : f32 to vector<1x128xf32>
    %36 = arith.mulf %33, %35 : vector<1x128xf32>
    %37 = arith.addf %25, %36 : vector<1x128xf32>
    %c3 = arith.constant 3 : index
    %38 = memref.load %arg1[%c3] : memref<5xf32, #tpu.memory_space<smem>>
    %39 = vector.broadcast %38 : f32 to vector<1x128xf32>
    %40 = arith.mulf %0, %39 : vector<1x128xf32>
    %c3_11 = arith.constant 3 : index
    %41 = memref.load %arg2[%c3_11] : memref<5xf32, #tpu.memory_space<smem>>
    %42 = vector.broadcast %41 : f32 to vector<1x128xf32>
    %43 = arith.addf %40, %42 : vector<1x128xf32>
    %cst_12 = arith.constant 0.000000e+00 : f32
    %44 = vector.broadcast %cst_12 : f32 to vector<1x128xf32>
    %45 = arith.maximumf %43, %44 : vector<1x128xf32>
    %c3_13 = arith.constant 3 : index
    %46 = memref.load %arg3[%c3_13] : memref<5xf32, #tpu.memory_space<smem>>
    %47 = vector.broadcast %46 : f32 to vector<1x128xf32>
    %48 = arith.mulf %45, %47 : vector<1x128xf32>
    %49 = arith.addf %37, %48 : vector<1x128xf32>
    %c4 = arith.constant 4 : index
    %50 = memref.load %arg1[%c4] : memref<5xf32, #tpu.memory_space<smem>>
    %51 = vector.broadcast %50 : f32 to vector<1x128xf32>
    %52 = arith.mulf %0, %51 : vector<1x128xf32>
    %c4_14 = arith.constant 4 : index
    %53 = memref.load %arg2[%c4_14] : memref<5xf32, #tpu.memory_space<smem>>
    %54 = vector.broadcast %53 : f32 to vector<1x128xf32>
    %55 = arith.addf %52, %54 : vector<1x128xf32>
    %cst_15 = arith.constant 0.000000e+00 : f32
    %56 = vector.broadcast %cst_15 : f32 to vector<1x128xf32>
    %57 = arith.maximumf %55, %56 : vector<1x128xf32>
    %c4_16 = arith.constant 4 : index
    %58 = memref.load %arg3[%c4_16] : memref<5xf32, #tpu.memory_space<smem>>
    %59 = vector.broadcast %58 : f32 to vector<1x128xf32>
    %60 = arith.mulf %57, %59 : vector<1x128xf32>
    %61 = arith.addf %49, %60 : vector<1x128xf32>
    %c0_17 = arith.constant 0 : index
    %62 = memref.load %arg4[%c0_17] : memref<1xf32, #tpu.memory_space<smem>>
    %63 = vector.broadcast %62 : f32 to vector<1x128xf32>
    %64 = arith.addf %61, %63 : vector<1x128xf32>
    %cst_18 = arith.constant 5.000000e-01 : f32
    %65 = vector.broadcast %cst_18 : f32 to vector<1x128xf32>
    %66 = arith.mulf %65, %64 : vector<1x128xf32>
    %67 = math.tanh %66 : vector<1x128xf32>
    %cst_19 = arith.constant 1.000000e+00 : f32
    %68 = vector.broadcast %cst_19 : f32 to vector<1x128xf32>
    %69 = arith.addf %67, %68 : vector<1x128xf32>
    %cst_20 = arith.constant 5.000000e-01 : f32
    %70 = vector.broadcast %cst_20 : f32 to vector<1x128xf32>
    %71 = arith.mulf %70, %69 : vector<1x128xf32>
    %c0_21 = arith.constant 0 : index
    %c0_22 = arith.constant 0 : index
    %72 = vector.load %arg6[%c0_21, %c0_22] : memref<1x128xf32, #tpu.memory_space<vmem>>, vector<1x128xf32>
    tpu.vector_store %arg6[%c0_21, %c0_22], %71 {strides = array<i32>} : memref<1x128xf32, #tpu.memory_space<vmem>>, vector<1x128xf32>,
    return
  }
  func.func @transform_0(%arg0: i32) -> i32 {
    %c0_i32 = arith.constant 0 : i32
    %c0_i32_0 = arith.constant 0 : i32
    return %c0_i32 : i32
  }
  func.func @transform_1(%arg0: i32) -> i32 {
    %c0_i32 = arith.constant 0 : i32
    %c0_i32_0 = arith.constant 0 : i32
    return %c0_i32 : i32
  }
  func.func @transform_2(%arg0: i32) -> i32 {
    %c0_i32 = arith.constant 0 : i32
    %c0_i32_0 = arith.constant 0 : i32
    return %c0_i32 : i32
  }
  func.func @transform_3(%arg0: i32) -> i32 {
    %c0_i32 = arith.constant 0 : i32
    %c0_i32_0 = arith.constant 0 : i32
    return %c0_i32 : i32
  }
  func.func @transform_4(%arg0: i32) -> (i32, i32) {
    %c0_i32 = arith.constant 0 : i32
    %c0_i32_0 = arith.constant 0 : i32
    return %arg0, %c0_i32 : i32, i32
  }
  func.func @transform_5(%arg0: i32) -> (i32, i32) {
    %c0_i32 = arith.constant 0 : i32
    %c0_i32_0 = arith.constant 0 : i32
    return %arg0, %c0_i32 : i32, i32
  }
}

</mosaic_0001>

<llo_original>
// kernel: simplenet_forward.1
$region0: #{simplenet_forward.1}
  #allocation0 [shape = 'u32[]', space=smem, size = 0x4, offset = 0x4, fixed_abs, tag = 'smem constant byte address 0x4 - core index']
  #allocation1 [shape = 'u32[144,128]{1,0:T(1,128)}', space=vmem, size = 0x12000, scoped, tag = 'internal scratch']
  #allocation2 [shape = 'f32[1]{0:T(128)S(6)}', space=smem, size = 0x200, scoped, tag = 'scoped memory for simplenet_forward.1']
  %s0 = inlined_call_operand.vmem [shape: f32[5], index: 0, kind: input, shape index: {}]
  %s1 = inlined_call_operand.vmem [shape: f32[5], index: 1, kind: input, shape index: {}]
  %s2 = inlined_call_operand.vmem [shape: f32[5], index: 2, kind: input, shape index: {}]
  %s3 = inlined_call_operand.<no memory space> [shape: f32[1], index: 3, kind: input, shape index: {}]
  %s4 = inlined_call_operand.vmem [shape: f32[1,128], index: 4, kind: input, shape index: {}]
  %s5 = inlined_call_operand.vmem [shape: f32[1,128], index: 5, kind: output, shape index: {}]
  %s6 = sld [smem:[#allocation0]]
  $region42: #{simplenet_forward.1} parent=0
    _
  %s8 = ssub.s32 1, %s6
  %s9 = scalar_select 0, %s8, %s6
  %10 = sst [smem:[#allocation2]] %s3
  $region1: #{simplenet_forward.1} parent=0
    #allocation3 [shape = 'u8[512]{0}', space=smem, size = 0x200, scoped, tag = 'input window, operand 0, single buffered']
    #allocation4 [shape = 's32[1]{0}', space=sflag, size = 0x4, scoped, tag = 'scoped memory for simplenet_forward.1']
    #allocation5 [shape = 'u8[512]{0}', space=smem, size = 0x200, scoped, tag = 'input window, operand 1, single buffered']
    #allocation6 [shape = 's32[1]{0}', space=sflag, size = 0x4, scoped, tag = 'scoped memory for simplenet_forward.1']
    #allocation7 [shape = 'u8[512]{0}', space=smem, size = 0x200, scoped, tag = 'input window, operand 2, single buffered']
    %11 = vsyncpa [#allocation4], 0
    %12 = vsyncpa [#allocation6], 0
    // Predicated region
    $region2: #{simplenet_forward.1} parent=1 // pred_check
      _
    $region3: #{simplenet_forward.1} parent=1 // pred_check_branch
      %14 = sbr.rel (0) target = $region5
    $region4: #{simplenet_forward.1} parent=1 // pred_region
      %s16 = ssub.s32 16, 16
      %17 = vsyncadd [#allocation4], %s16
      %s19 = sshll.u32 %s0, 4
      %s20 = int_to_ptr.vmem [resolvable:$true] %s19
      %22 = dma.vmem_to_smem %s20, 16, [#allocation3], [#allocation4]
    $region5: #{simplenet_forward.1} parent=1 // pred_fallthru
      _
    // Predicated region
    $region6: #{simplenet_forward.1} parent=1 // pred_check
      _
    $region7: #{simplenet_forward.1} parent=1 // pred_check_branch
      %24 = sbr.rel (0) target = $region9
    $region8: #{simplenet_forward.1} parent=1 // pred_region
      %s26 = ssub.s32 16, 16
      %27 = vsyncadd [#allocation6], %s26
      %s29 = sshll.u32 %s1, 4
      %s30 = int_to_ptr.vmem [resolvable:$true] %s29
      %32 = dma.vmem_to_smem %s30, 16, [#allocation5], [#allocation6]
    $region9: #{simplenet_forward.1} parent=1 // pred_fallthru
      _
    // Predicated region
    $region10: #{simplenet_forward.1} parent=1 // pred_check
      _
    $region11: #{simplenet_forward.1} parent=1 // pred_check_branch
      %34 = sbr.rel (0) target = $region13
    $region12: #{simplenet_forward.1} parent=1 // pred_region
      %s36 = ssub.s32 16, 16
      %37 = vsyncadd [#allocation6], %s36
      %s39 = sshll.u32 %s2, 4
      %s40 = int_to_ptr.vmem [resolvable:$true] %s39
      %42 = dma.vmem_to_smem %s40, 16, [#allocation7], [#allocation6]
    $region13: #{simplenet_forward.1} parent=1 // pred_fallthru
      _
    // Predicated region
    $region14: #{simplenet_forward.1} parent=1 // pred_check
      _
    $region15: #{simplenet_forward.1} parent=1 // pred_check_branch
      %44 = sbr.rel (0) target = $region17
    $region16: #{simplenet_forward.1} parent=1 // pred_region
      _
    $region17: #{simplenet_forward.1} parent=1 // pred_fallthru
      _
    // Predicated region
    $region18: #{simplenet_forward.1} parent=1 // pred_check
      _
    $region19: #{simplenet_forward.1} parent=1 // pred_check_branch
      %46 = sbr.rel (0) target = $region21
    $region20: #{simplenet_forward.1} parent=1 // pred_region
      _
    $region21: #{simplenet_forward.1} parent=1 // pred_fallthru
      _
    // Predicated region
    $region22: #{simplenet_forward.1} parent=1 // pred_check
      _
    $region23: #{simplenet_forward.1} parent=1 // pred_check_branch
      %48 = sbr.rel (0) target = $region25
    $region24: #{simplenet_forward.1} parent=1 // pred_region
      %49 = dma.done [#allocation4], 16
    $region25: #{simplenet_forward.1} parent=1 // pred_fallthru
      _
    // Predicated region
    $region26: #{simplenet_forward.1} parent=1 // pred_check
      _
    $region27: #{simplenet_forward.1} parent=1 // pred_check_branch
      %51 = sbr.rel (0) target = $region29
    $region28: #{simplenet_forward.1} parent=1 // pred_region
      %52 = dma.done [#allocation6], 16
    $region29: #{simplenet_forward.1} parent=1 // pred_fallthru
      _
    // Predicated region
    $region30: #{simplenet_forward.1} parent=1 // pred_check
      _
    $region31: #{simplenet_forward.1} parent=1 // pred_check_branch
      %54 = sbr.rel (0) target = $region33
    $region32: #{simplenet_forward.1} parent=1 // pred_region
      %55 = dma.done [#allocation6], 16
    $region33: #{simplenet_forward.1} parent=1 // pred_fallthru
      _
    %56 = sfence
    %v57 = vld [vmem:[%s4] sm:$0x1]
    %s58 = sld [smem:[#allocation3]]
    %v59 = vstv %s58
    %v60 = vmul.f32 %v57, %v59
    %s61 = sld [smem:[#allocation5]]
    %v62 = vstv %s61
    %v63 = vadd.f32 %v60, %v62
    %v64 = vmax.f32 %v63, 0.0
    %s65 = sld [smem:[#allocation7]]
    %v66 = vstv %s65
    %v67 = vmul.f32 %v64, %v66
    %v68 = vadd.f32 %v67, 0.0
    %s69 = sld [smem:[#allocation3 + $0x1]]
    %v70 = vstv %s69
    %v71 = vmul.f32 %v57, %v70
    %s72 = sld [smem:[#allocation5 + $0x1]]
    %v73 = vstv %s72
    %v74 = vadd.f32 %v71, %v73
    %v75 = vmax.f32 %v74, 0.0
    %s76 = sld [smem:[#allocation7 + $0x1]]
    %v77 = vstv %s76
    %v78 = vmul.f32 %v75, %v77
    %v79 = vadd.f32 %v68, %v78
    %s80 = sld [smem:[#allocation3 + $0x2]]
    %v81 = vstv %s80
    %v82 = vmul.f32 %v57, %v81
    %s83 = sld [smem:[#allocation5 + $0x2]]
    %v84 = vstv %s83
    %v85 = vadd.f32 %v82, %v84
    %v86 = vmax.f32 %v85, 0.0
    %s87 = sld [smem:[#allocation7 + $0x2]]
    %v88 = vstv %s87
    %v89 = vmul.f32 %v86, %v88
    %v90 = vadd.f32 %v79, %v89
    %s91 = sld [smem:[#allocation3 + $0x3]]
    %v92 = vstv %s91
    %v93 = vmul.f32 %v57, %v92
    %s94 = sld [smem:[#allocation5 + $0x3]]
    %v95 = vstv %s94
    %v96 = vadd.f32 %v93, %v95
    %v97 = vmax.f32 %v96, 0.0
    %s98 = sld [smem:[#allocation7 + $0x3]]
    %v99 = vstv %s98
    %v100 = vmul.f32 %v97, %v99
    %v101 = vadd.f32 %v90, %v100
    %s102 = sld [smem:[#allocation3 + $0x4]]
    %v103 = vstv %s102
    %v104 = vmul.f32 %v57, %v103
    %s105 = sld [smem:[#allocation5 + $0x4]]
    %v106 = vstv %s105
    %v107 = vadd.f32 %v104, %v106
    %v108 = vmax.f32 %v107, 0.0
    %s109 = sld [smem:[#allocation7 + $0x4]]
    %v110 = vstv %s109
    %v111 = vmul.f32 %v108, %v110
    %v112 = vadd.f32 %v101, %v111
    %s113 = sld [smem:[#allocation2]]
    %v114 = vstv %s113
    %v115 = vadd.f32 %v112, %v114
    %v116 = vmul.f32 %v115, 0.5
    %v117 = vtanh.pop %v116
    %v118 = vadd.f32 %v117, 1.0
    %v119 = vmul.f32 %v118, 0.5
    %120 = vst [vmem:[%s5] sm:$0x1] %v119
    // Predicated region
    $region34: #{simplenet_forward.1} parent=1 // pred_check
      _
    $region35: #{simplenet_forward.1} parent=1 // pred_check_branch
      %122 = sbr.rel (0) target = $region37
    $region36: #{simplenet_forward.1} parent=1 // pred_region
      _
    $region37: #{simplenet_forward.1} parent=1 // pred_fallthru
      _
    // Predicated region
    $region38: #{simplenet_forward.1} parent=1 // pred_check
      _
    $region39: #{simplenet_forward.1} parent=1 // pred_check_branch
      %124 = sbr.rel (0) target = $region41
    $region40: #{simplenet_forward.1} parent=1 // pred_region
      _
    $region41: #{simplenet_forward.1} parent=1 // pred_fallthru
      _
    %125 = vsyncpa [#allocation4], 1
    %126 = vsyncpa [#allocation6], 1

</llo_original>
